<compile_context>
chip_gen: v5e
topology: v5e:2x2
jax: 0.10.0
libtpu: 0.0.40
codegen_flags: <defaults>
</compile_context>

<pallas_src>
import functools

import jax
import jax.numpy as jnp
import numpy as np
from jax.experimental import pallas as pl
from jax.experimental.pallas import tpu as pltpu

ESP = 1e-08
LANES = 128
SUBLANES = 8


def _mf_loss_kernel(p_ref, g_ref, out_ref, acc_ref, *, n_rows, tile_rows, acc_rows):
    """Streaming masked sum of sqrt(p*g+eps) + sqrt((1-p)*(1-g)+eps)."""
    c = pl.program_id(0)                  # split index (one per TensorCore)
    i = pl.program_id(1)                  # sequential step within the split
    n_steps = pl.num_programs(1)

    @pl.when(i == 0)
    def _():
        acc_ref[...] = jnp.zeros_like(acc_ref)

    # Cast at load: HBM traffic stays in the native input dtype.
    p = p_ref[...].astype(jnp.float32)
    g = g_ref[...].astype(jnp.float32)
    # NOTE: matches the PyTorch reference -- no clamping, so p/g outside [0,1]
    # can produce NaN exactly as torch.sqrt would.
    s = jnp.sqrt(p * g + ESP) + jnp.sqrt((1.0 - p) * (1.0 - g) + ESP)

    width = s.shape[-1]

    def _partial(x):
        if acc_rows == 1:
            return jnp.sum(x, axis=0, keepdims=True)
        # Sum groups of 8 sublanes (tile-aligned, pure VPU add-tree); the
        # cross-sublane reduce is deferred to the epilogue.
        return jnp.sum(x.reshape(tile_rows // acc_rows, acc_rows, width), axis=0)

    start_row = (c * n_steps + i) * tile_rows

    # Fast path: block lies entirely inside valid rows -> no masking cost.
    @pl.when(start_row + tile_rows <= n_rows)
    def _():
        acc_ref[...] += _partial(s)

    # Boundary path: block overlaps (or lies past) the end of the array.
    # Over-run rows contain garbage; discard them with a select (NaN-safe).
    @pl.when(start_row + tile_rows > n_rows)
    def _():
        row_ids = start_row + jax.lax.broadcasted_iota(jnp.int32, s.shape, 0)
        acc_ref[...] += _partial(jnp.where(row_ids < n_rows, s, 0.0))

    # Single cross-sublane/lane (XLU) reduce + SMEM scalar write per split.
    @pl.when(i == n_steps - 1)
    def _():
        out_ref[0, 0] = jnp.sum(acc_ref[...])


def _round_up(x, m):
    return (x + m - 1) // m * m


@functools.partial(jax.jit, static_argnames=("tile_rows", "num_splits"))
def multi_fidelity_loss(p, g, tile_rows=8192, num_splits=1):
    """mean over all elements of 1 - sqrt(p*g+esp) - sqrt((1-p)*(1-g)+esp).

    tile_rows:  rows (of 128 lanes on the fast path) per grid step. 8192
                (4 MiB f32 / input / buffer) suits v6e and v7x; 4096 keeps the
                working set tiny on v5e; 16384 shaves a bit more per-step
                overhead on v7x (vmem_limit_bytes below scales automatically).
    num_splits: 1 on single-TensorCore chips (v5e/v6e). 2 on v7x: the leading
                grid axis is then marked CORE_PARALLEL so both TensorCores run.
    """
    assert p.shape == g.shape, "p and g must have the same shape"
    assert num_splits >= 1
    n_elem = int(np.prod(p.shape))

    # Lane-dense 2-D streaming view without any padding or dtype copy: both
    # reshapes below are contiguous, i.e. free (no extra HBM pass).
    if n_elem % LANES == 0:
        width = LANES
    else:
        width = p.shape[-1] if p.ndim > 1 else n_elem
    rows = n_elem // width
    p2 = p.reshape(rows, width)
    g2 = g.reshape(rows, width)

    # Row granularity: 8 sublanes scaled by dtype packing (f32->8, bf16->16).
    itemsize = jnp.dtype(p.dtype).itemsize
    row_align = SUBLANES * max(1, 4 // itemsize)
    tr = max(row_align, min(_round_up(tile_rows, row_align),
                            _round_up(rows, row_align)))

    n_blocks = -(-rows // tr)
    steps_per_split = -(-n_blocks // num_splits)
    grid = (num_splits, steps_per_split)

    def in_map(c, i):
        # Clamp so over-run steps (num_splits not dividing n_blocks) re-read
        # the last real block; the in-kernel row mask zeroes their contribution.
        blk = jnp.minimum(c * steps_per_split + i, n_blocks - 1)
        return (blk, 0)

    # Vreg-shaped accumulator on the lane-dense path; single row otherwise.
    acc_rows = SUBLANES if (width == LANES and tr % SUBLANES == 0) else 1

    kernel = functools.partial(
        _mf_loss_kernel, n_rows=rows, tile_rows=tr, acc_rows=acc_rows)

    # 2 inputs x 2 pipeline buffers x one block, plus headroom. Explicitly
    # raises v5e's 16 MiB default scoped limit and stays under v7x's 64 MiB
    # physical VMEM.
    block_bytes = tr * width * itemsize
    vmem_limit = int(min(60 << 20, max(24 << 20, 4 * block_bytes + (8 << 20))))

    dim_sem = (pltpu.CORE_PARALLEL if num_splits > 1 else pltpu.ARBITRARY,
               pltpu.ARBITRARY)

    partials = pl.pallas_call(
        kernel,
        out_shape=jax.ShapeDtypeStruct((num_splits, 1), jnp.float32),
        grid_spec=pltpu.PrefetchScalarGridSpec(
            num_scalar_prefetch=0,
            grid=grid,
            in_specs=[
                pl.BlockSpec((tr, width), in_map),
                pl.BlockSpec((tr, width), in_map),
            ],
            out_specs=pl.BlockSpec(
                (1, 1), lambda c, i: (c, 0), memory_space=pltpu.SMEM),
            scratch_shapes=[pltpu.VMEM((acc_rows, width), jnp.float32)],
        ),
        compiler_params=pltpu.CompilerParams(
            dimension_semantics=dim_sem,
            vmem_limit_bytes=vmem_limit,
        ),
    )(p2, g2)

    # mean of (1 - s) over all elements == (N - sum(s)) / N ; the "1 -", the
    # /C and the final mean of the PyTorch loop fold into this one scalar op.
    total = jnp.sum(partials)
    return (jnp.float32(n_elem) - total) / jnp.float32(n_elem)


def _reference(p, g):
    p = p.astype(jnp.float32)
    g = g.astype(jnp.float32)
    loss = 1.0 - (jnp.sqrt(p * g + ESP) + jnp.sqrt((1.0 - p) * (1.0 - g) + ESP))
    return jnp.mean(loss)


if __name__ == "__main__":
    key = jax.random.PRNGKey(0)
    kp, kg = jax.random.split(key)

    # [batch, num_classes] probabilities, same convention as the PyTorch module.
    batch, num_classes = 16, 8
    p = jax.random.uniform(kp, (batch, num_classes), dtype=jnp.float32)
    g = jax.random.uniform(kg, (batch, num_classes), dtype=jnp.float32)
    out = jax.block_until_ready(multi_fidelity_loss(p, g))
    np.testing.assert_allclose(
        np.asarray(out), np.asarray(_reference(p, g)), rtol=1e-5, atol=1e-6)

    # ragged size (not a multiple of 128) -> native-width path + row mask
    p2 = jax.random.uniform(kp, (37, 11), dtype=jnp.float32)
    g2 = jax.random.uniform(kg, (37, 11), dtype=jnp.float32)
    np.testing.assert_allclose(
        np.asarray(multi_fidelity_loss(p2, g2)),
        np.asarray(_reference(p2, g2)), rtol=1e-5, atol=1e-6)

    # multi-step grid exercising the fast path and the boundary-mask path
    p3 = jax.random.uniform(kp, (100, 128), dtype=jnp.float32)
    g3 = jax.random.uniform(kg, (100, 128), dtype=jnp.float32)
    np.testing.assert_allclose(
        np.asarray(multi_fidelity_loss(p3, g3, tile_rows=16)),
        np.asarray(_reference(p3, g3)), rtol=1e-5, atol=1e-6)

    # bf16 inputs stream natively (no wrapper upcast); upcast happens in-kernel
    p4 = jax.random.uniform(kp, (64, 32), dtype=jnp.float32).astype(jnp.bfloat16)
    g4 = jax.random.uniform(kg, (64, 32), dtype=jnp.float32).astype(jnp.bfloat16)
    np.testing.assert_allclose(
        np.asarray(multi_fidelity_loss(p4, g4)),
        np.asarray(_reference(p4, g4)), rtol=2e-3, atol=2e-3)

    print("KERNEL_OK")
</pallas_src>

<mosaic_0001>
module attributes {stable_mosaic.version = 11 : i64} {
  func.func @_mf_loss_kernel(%arg0: i32, %arg1: i32, %arg2: memref<8x128xf32, #tpu.memory_space<vmem>>, %arg3: memref<8x128xf32, #tpu.memory_space<vmem>>, %arg4: memref<1x1xf32, #tpu.memory_space<smem>>, %arg5: memref<8x128xf32, #tpu.memory_space<vmem>>) attributes {dimension_semantics = [#tpu.dimension_semantics<arbitrary>, #tpu.dimension_semantics<arbitrary>], iteration_bounds = array<i64: 1, 1>, scalar_prefetch = 0 : i64, scratch_operands = 1 : i64, tpu.core_type = #tpu.core_type<tc>, window_params = [{transform_indices = @transform_0, window_bounds = array<i64: 8, 128>}, {transform_indices = @transform_1, window_bounds = array<i64: 8, 128>}, {transform_indices = @transform_2, window_bounds = array<i64: 1, 1>}]} {
    %c0_i32 = arith.constant 0 : i32
    %0 = arith.cmpi eq, %arg1, %c0_i32 : i32
    %1 = arith.extui %0 : i1 to i32
    %c0_i32_0 = arith.constant 0 : i32
    %2 = arith.cmpi ne, %1, %c0_i32_0 : i32
    scf.if %2 {
      %cst_15 = arith.constant 0.000000e+00 : f32
      %32 = vector.broadcast %cst_15 : f32 to vector<8x128xf32>
      %c0_16 = arith.constant 0 : index
      %c0_17 = arith.constant 0 : index
      %33 = vector.load %arg5[%c0_16, %c0_17] : memref<8x128xf32, #tpu.memory_space<vmem>>, vector<8x128xf32>
      tpu.vector_store %arg5[%c0_16, %c0_17], %32 {strides = array<i32>} : memref<8x128xf32, #tpu.memory_space<vmem>>, vector<8x128xf32>,
    } else {
    }
    %c0 = arith.constant 0 : index
    %c0_1 = arith.constant 0 : index
    %3 = vector.load %arg2[%c0, %c0_1] : memref<8x128xf32, #tpu.memory_space<vmem>>, vector<8x128xf32>
    %c0_2 = arith.constant 0 : index
    %c0_3 = arith.constant 0 : index
    %4 = vector.load %arg3[%c0_2, %c0_3] : memref<8x128xf32, #tpu.memory_space<vmem>>, vector<8x128xf32>
    %5 = arith.mulf %3, %4 : vector<8x128xf32>
    %cst = arith.constant 9.99999993E-9 : f32
    %6 = vector.broadcast %cst : f32 to vector<8x128xf32>
    %7 = arith.addf %5, %6 : vector<8x128xf32>
    %8 = math.sqrt %7 : vector<8x128xf32>
    %cst_4 = arith.constant 1.000000e+00 : f32
    %9 = vector.broadcast %cst_4 : f32 to vector<8x128xf32>
    %10 = arith.subf %9, %3 : vector<8x128xf32>
    %cst_5 = arith.constant 1.000000e+00 : f32
    %11 = vector.broadcast %cst_5 : f32 to vector<8x128xf32>
    %12 = arith.subf %11, %4 : vector<8x128xf32>
    %13 = arith.mulf %10, %12 : vector<8x128xf32>
    %cst_6 = arith.constant 9.99999993E-9 : f32
    %14 = vector.broadcast %cst_6 : f32 to vector<8x128xf32>
    %15 = arith.addf %13, %14 : vector<8x128xf32>
    %16 = math.sqrt %15 : vector<8x128xf32>
    %17 = arith.addf %8, %16 : vector<8x128xf32>
    %c1_i32 = arith.constant 1 : i32
    %18 = arith.muli %arg0, %c1_i32 : i32
    %19 = arith.addi %18, %arg1 : i32
    %c8_i32 = arith.constant 8 : i32
    %20 = arith.muli %19, %c8_i32 : i32
    %c8_i32_7 = arith.constant 8 : i32
    %21 = arith.addi %20, %c8_i32_7 : i32
    %c1_i32_8 = arith.constant 1 : i32
    %22 = arith.cmpi sle, %21, %c1_i32_8 : i32
    %23 = arith.extui %22 : i1 to i32
    %c0_i32_9 = arith.constant 0 : i32
    %24 = arith.cmpi ne, %23, %c0_i32_9 : i32
    scf.if %24 {
      %c0_15 = arith.constant 0 : index
      %c0_16 = arith.constant 0 : index
      %32 = vector.load %arg5[%c0_15, %c0_16] : memref<8x128xf32, #tpu.memory_space<vmem>>, vector<8x128xf32>
      %33 = vector.shape_cast %17 : vector<8x128xf32> to vector<1x8x128xf32>
      %cst_17 = arith.constant dense<0.000000e+00> : vector<8x128xf32>
      %34 = vector.multi_reduction <add>, %33, %cst_17 [0] : vector<1x8x128xf32> to vector<8x128xf32>
      %35 = arith.addf %32, %34 : vector<8x128xf32>
      %c0_18 = arith.constant 0 : index
      %c0_19 = arith.constant 0 : index
      %36 = vector.load %arg5[%c0_18, %c0_19] : memref<8x128xf32, #tpu.memory_space<vmem>>, vector<8x128xf32>
      tpu.vector_store %arg5[%c0_18, %c0_19], %35 {strides = array<i32>} : memref<8x128xf32, #tpu.memory_space<vmem>>, vector<8x128xf32>,
    } else {
    }
    %c8_i32_10 = arith.constant 8 : i32
    %25 = arith.addi %20, %c8_i32_10 : i32
    %c1_i32_11 = arith.constant 1 : i32
    %26 = arith.cmpi sgt, %25, %c1_i32_11 : i32
    %27 = arith.extui %26 : i1 to i32
    %c0_i32_12 = arith.constant 0 : i32
    %28 = arith.cmpi ne, %27, %c0_i32_12 : i32
    scf.if %28 {
      %32 = tpu.iota {dimensions = array<i32: 0>} : vector<8x128xi32>
      %33 = vector.broadcast %20 : i32 to vector<8x128xi32>
      %34 = arith.addi %33, %32 : vector<8x128xi32>
      %c0_15 = arith.constant 0 : index
      %c0_16 = arith.constant 0 : index
      %35 = vector.load %arg5[%c0_15, %c0_16] : memref<8x128xf32, #tpu.memory_space<vmem>>, vector<8x128xf32>
      %c1_i32_17 = arith.constant 1 : i32
      %36 = vector.broadcast %c1_i32_17 : i32 to vector<8x128xi32>
      %37 = arith.cmpi slt, %34, %36 : vector<8x128xi32>
      %cst_18 = arith.constant 0.000000e+00 : f32
      %38 = vector.broadcast %cst_18 : f32 to vector<8x128xf32>
      %39 = arith.select %37, %17, %38 : vector<8x128xi1>, vector<8x128xf32>
      %40 = vector.shape_cast %39 : vector<8x128xf32> to vector<1x8x128xf32>
      %cst_19 = arith.constant dense<0.000000e+00> : vector<8x128xf32>
      %41 = vector.multi_reduction <add>, %40, %cst_19 [0] : vector<1x8x128xf32> to vector<8x128xf32>
      %42 = arith.addf %35, %41 : vector<8x128xf32>
      %c0_20 = arith.constant 0 : index
      %c0_21 = arith.constant 0 : index
      %43 = vector.load %arg5[%c0_20, %c0_21] : memref<8x128xf32, #tpu.memory_space<vmem>>, vector<8x128xf32>
      tpu.vector_store %arg5[%c0_20, %c0_21], %42 {strides = array<i32>} : memref<8x128xf32, #tpu.memory_space<vmem>>, vector<8x128xf32>,
    } else {
    }
    %c0_i32_13 = arith.constant 0 : i32
    %29 = arith.cmpi eq, %arg1, %c0_i32_13 : i32
    %30 = arith.extui %29 : i1 to i32
    %c0_i32_14 = arith.constant 0 : i32
    %31 = arith.cmpi ne, %30, %c0_i32_14 : i32
    scf.if %31 {
      %c0_15 = arith.constant 0 : index
      %c0_16 = arith.constant 0 : index
      %32 = vector.load %arg5[%c0_15, %c0_16] : memref<8x128xf32, #tpu.memory_space<vmem>>, vector<8x128xf32>
      %33 = vector.shape_cast %32 : vector<8x128xf32> to vector<1x8x128xf32>
      %cst_17 = arith.constant dense<0.000000e+00> : vector<1xf32>
      %34 = vector.multi_reduction <add>, %33, %cst_17 [1, 2] : vector<1x8x128xf32> to vector<1xf32>
      %35 = vector.shape_cast %34 : vector<1xf32> to vector<1x1x1xf32>
      %36 = vector.extract %35[0, 0, 0] : f32 from vector<1x1x1xf32>
      %c0_18 = arith.constant 0 : index
      %c0_19 = arith.constant 0 : index
      %37 = memref.load %arg4[%c0_18, %c0_19] : memref<1x1xf32, #tpu.memory_space<smem>>
      memref.store %36, %arg4[%c0_18, %c0_19] : memref<1x1xf32, #tpu.memory_space<smem>>
    } else {
    }
    return
  }
  func.func @transform_0(%arg0: i32, %arg1: i32) -> (i32, i32) {
    %c1_i32 = arith.constant 1 : i32
    %0 = arith.muli %arg0, %c1_i32 : i32
    %1 = arith.addi %0, %arg1 : i32
    %c0_i32 = arith.constant 0 : i32
    %2 = arith.minsi %1, %c0_i32 : i32
    %c0_i32_0 = arith.constant 0 : i32
    %c0_i32_1 = arith.constant 0 : i32
    return %2, %c0_i32_0 : i32, i32
  }
  func.func @transform_1(%arg0: i32, %arg1: i32) -> (i32, i32) {
    %c1_i32 = arith.constant 1 : i32
    %0 = arith.muli %arg0, %c1_i32 : i32
    %1 = arith.addi %0, %arg1 : i32
    %c0_i32 = arith.constant 0 : i32
    %2 = arith.minsi %1, %c0_i32 : i32
    %c0_i32_0 = arith.constant 0 : i32
    %c0_i32_1 = arith.constant 0 : i32
    return %2, %c0_i32_0 : i32, i32
  }
  func.func @transform_2(%arg0: i32, %arg1: i32) -> (i32, i32) {
    %c0_i32 = arith.constant 0 : i32
    %c0_i32_0 = arith.constant 0 : i32
    return %arg0, %c0_i32 : i32, i32
  }
}

</mosaic_0001>

<llo_original>
// kernel: multi_fidelity_loss.1
$region0: #{multi_fidelity_loss.1}
  #allocation0 [shape = 'u32[]', space=smem, size = 0x4, offset = 0x4, fixed_abs, tag = 'smem constant byte address 0x4 - core index']
  #allocation1 [shape = 'u32[72,128]{1,0:T(1,128)}', space=vmem, size = 0x9000, scoped, tag = 'internal scratch']
  #allocation2 [shape = 'f32[8,128]{1,0:T(8,128)}', space=vmem, size = 0x1000, scoped, tag = 'scratch operand']
  %s0 = inlined_call_operand.vmem [shape: f32[1,128], index: 0, kind: input, shape index: {}]
  %s1 = inlined_call_operand.vmem [shape: f32[1,128], index: 1, kind: input, shape index: {}]
  %s2 = inlined_call_operand.hbm [shape: f32[1,1], index: 2, kind: output, shape index: {}]
  %s3 = sld [smem:[#allocation0]]
  $region34: #{multi_fidelity_loss.1} parent=0
    _
  %s5 = ssub.s32 1, %s3
  %s6 = scalar_select 0, %s5, %s3
  $region1: #{multi_fidelity_loss.1} parent=0
    #allocation3 [shape = 'u8[512]{0}', space=smem, size = 0x200, scoped, tag = 'output window, operand 0, single buffered']
    #allocation4 [shape = 's32[1]{0}', space=sflag, size = 0x4, scoped, tag = 'scoped memory for multi_fidelity_loss.1']
    %7 = vsyncpa [#allocation4], 0
    // Predicated region
    $region2: #{multi_fidelity_loss.1} parent=1 // pred_check
      _
    $region3: #{multi_fidelity_loss.1} parent=1 // pred_check_branch
      %9 = sbr.rel (0) target = $region5
    $region4: #{multi_fidelity_loss.1} parent=1 // pred_region
      %s10 = sadd.s32 0, 0
      %p11 = scmp.lt.s32.totalorder %s10, 0
      %s12 = scalar_select %p11, %s10, 0
      %s13 = smul.u32 8, %s12
      %s14 = ssub.s32 1, %s13
      %p15 = scmp.lt.s32.totalorder %s13, 0
      %s16 = scalar_select %p15, %s13, 0
      %s17 = scalar_lea.vmem %s0, %s16
      %s18 = sadd.s32 0, 0
      %p19 = scmp.lt.s32.totalorder %s18, 0
      %s20 = scalar_select %p19, %s18, 0
      %s21 = smul.u32 8, %s20
      %s22 = ssub.s32 1, %s21
    $region5: #{multi_fidelity_loss.1} parent=1 // pred_fallthru
      _
    // Predicated region
    $region6: #{multi_fidelity_loss.1} parent=1 // pred_check
      _
    $region7: #{multi_fidelity_loss.1} parent=1 // pred_check_branch
      %24 = sbr.rel (0) target = $region9
    $region8: #{multi_fidelity_loss.1} parent=1 // pred_region
      %s25 = sadd.s32 0, 0
      %p26 = scmp.lt.s32.totalorder %s25, 0
      %s27 = scalar_select %p26, %s25, 0
      %s28 = smul.u32 8, %s27
      %s29 = ssub.s32 1, %s28
      %p30 = scmp.lt.s32.totalorder %s28, 0
      %s31 = scalar_select %p30, %s28, 0
      %s32 = scalar_lea.vmem %s1, %s31
      %s33 = sadd.s32 0, 0
      %p34 = scmp.lt.s32.totalorder %s33, 0
      %s35 = scalar_select %p34, %s33, 0
      %s36 = smul.u32 8, %s35
      %s37 = ssub.s32 1, %s36
    $region9: #{multi_fidelity_loss.1} parent=1 // pred_fallthru
      _
    %s38 = sadd.s32 0, 0
    %p39 = scmp.lt.s32.totalorder %s38, 0
    %s40 = scalar_select %p39, %s38, 0
    %s41 = smul.u32 8, %s40
    %s42 = ssub.s32 1, %s41
    %p43 = scmp.lt.s32.totalorder %s41, 0
    %s44 = scalar_select %p43, %s41, 0
    %s45 = scalar_lea.vmem %s0, %s44
    %s46 = sadd.s32 0, 0
    %p47 = scmp.lt.s32.totalorder %s46, 0
    %s48 = scalar_select %p47, %s46, 0
    %s49 = smul.u32 8, %s48
    %s50 = ssub.s32 1, %s49
    %p51 = scmp.lt.s32.totalorder %s49, 0
    %s52 = scalar_select %p51, %s49, 0
    %s53 = scalar_lea.vmem %s1, %s52
    %s54 = sadd.s32 0, 0
    %p55 = scmp.lt.s32.totalorder %s54, 0
    %s56 = scalar_select %p55, %s54, 0
    %s57 = smul.u32 8, %s56
    %s58 = ssub.s32 1, %s57
    %p59 = scmp.lt.s32.totalorder %s57, 0
    %s60 = scalar_select %p59, %s57, 0
    %s61 = scalar_lea.vmem %s0, %s60
    %s62 = sadd.s32 0, 0
    %p63 = scmp.lt.s32.totalorder %s62, 0
    %s64 = scalar_select %p63, %s62, 0
    %s65 = smul.u32 8, %s64
    %s66 = ssub.s32 1, %s65
    %s67 = sadd.s32 0, 0
    %p68 = scmp.lt.s32.totalorder %s67, 0
    %s69 = scalar_select %p68, %s67, 0
    %s70 = smul.u32 8, %s69
    %s71 = ssub.s32 1, %s70
    %p72 = scmp.lt.s32.totalorder %s70, 0
    %s73 = scalar_select %p72, %s70, 0
    %s74 = scalar_lea.vmem %s1, %s73
    %s75 = sadd.s32 0, 0
    %p76 = scmp.lt.s32.totalorder %s75, 0
    %s77 = scalar_select %p76, %s75, 0
    %s78 = smul.u32 8, %s77
    %s79 = ssub.s32 1, %s78
    %p80 = scmp.eq.s32.totalorder 0, 0
    // Predicated region
    $region10: #{multi_fidelity_loss.1} parent=1 // pred_check
      %p81 = pneg %p80
    $region11: #{multi_fidelity_loss.1} parent=1 // pred_check_branch
      %83 = sbr.rel (%p81) target = $region13
    $region12: #{multi_fidelity_loss.1} parent=1 // pred_region
      %84 = vst [vmem:[#allocation2] sm:$0xff] 0.0
    $region13: #{multi_fidelity_loss.1} parent=1 // pred_fallthru
      _
    %v85 = vld [vmem:[%s61] sm:$0xff]
    %v86 = vld [vmem:[%s74] sm:$0xff]
    %v87 = vmul.f32 %v85, %v86
    %v88 = vadd.f32 %v87, 1e-08
    %v89 = vrsqrt.pop %v88
    %v90 = vmul.f32 %v89, %v88
    %v91 = vmul.f32 %v90, %v89
    %v92 = vmul.f32 0.5, %v91
    %v93 = vsub.f32 1.5, %v92
    %v94 = vmul.f32 %v89, %v93
    %v95 = vmul.f32 %v88, %v94
    %vm96 = vcmp.eq.f32.partialorder %v88, inf
    %v97 = vsel %vm96, %v88, %v95
    %vm98 = vcmp.eq.f32.partialorder %v88, 0.0
    %v99 = vand.u32 %v88, 2147483648
    %v100 = vsel %vm98, %v99, %v97
    %v101 = vsub.f32 1.0, %v85
    %v102 = vsub.f32 1.0, %v86
    %v103 = vmul.f32 %v101, %v102
    %v104 = vadd.f32 %v103, 1e-08
    %v105 = vrsqrt.pop %v104
    %v106 = vmul.f32 %v105, %v104
    %v107 = vmul.f32 %v106, %v105
    %v108 = vmul.f32 0.5, %v107
    %v109 = vsub.f32 1.5, %v108
    %v110 = vmul.f32 %v105, %v109
    %v111 = vmul.f32 %v104, %v110
    %vm112 = vcmp.eq.f32.partialorder %v104, inf
    %v113 = vsel %vm112, %v104, %v111
    %vm114 = vcmp.eq.f32.partialorder %v104, 0.0
    %v115 = vand.u32 %v104, 2147483648
    %v116 = vsel %vm114, %v115, %v113
    %v117 = vadd.f32 %v100, %v116
    %s118 = sadd.s32 0, 0
    %s119 = smul.u32 %s118, 8
    %s120 = sadd.s32 %s119, 8
    %p121 = scmp.le.s32.totalorder %s120, 1
    // Predicated region
    $region14: #{multi_fidelity_loss.1} parent=1 // pred_check
      %p122 = pneg %p121
    $region15: #{multi_fidelity_loss.1} parent=1 // pred_check_branch
      %124 = sbr.rel (%p122) target = $region17
    $region16: #{multi_fidelity_loss.1} parent=1 // pred_region
      %v125 = vld [vmem:[#allocation2] sm:$0xff]
      %v126 = vadd.f32 %v117, 0.0
      %v127 = vadd.f32 %v125, %v126
      %128 = vst [vmem:[#allocation2] sm:$0xff] %v127
    $region17: #{multi_fidelity_loss.1} parent=1 // pred_fallthru
      _
    %p129 = scmp.gt.s32.totalorder %s120, 1
    // Predicated region
    $region18: #{multi_fidelity_loss.1} parent=1 // pred_check
      %p130 = pneg %p129
    $region19: #{multi_fidelity_loss.1} parent=1 // pred_check_branch
      %132 = sbr.rel (%p130) target = $region21
    $region20: #{multi_fidelity_loss.1} parent=1 // pred_region
      %v133 = vlaneseq
      %v134 = vshrl.u32 %v133, 7
      %v135 = vstv %s119
      %v136 = vadd.s32 %v135, %v134
      %v137 = vld [vmem:[#allocation2] sm:$0xff]
      %vm138 = vcmp.lt.s32.totalorder %v136, 1
      %v139 = vsel %vm138, %v117, 0.0
      %v140 = vadd.f32 %v139, 0.0
      %v141 = vadd.f32 %v137, %v140
      %142 = vst [vmem:[#allocation2] sm:$0xff] %v141
    $region21: #{multi_fidelity_loss.1} parent=1 // pred_fallthru
      _
    // Predicated region
    $region22: #{multi_fidelity_loss.1} parent=1 // pred_check
      %p143 = pneg %p80
    $region23: #{multi_fidelity_loss.1} parent=1 // pred_check_branch
      %145 = sbr.rel (%p143) target = $region25
    $region24: #{multi_fidelity_loss.1} parent=1 // pred_region
      %v146 = vld [vmem:[#allocation2] sm:$0xff]
      %147 = vadd.xlane.f32.xlu0 %v146
      %v148 = vpop.xlane.xlu0 %147
      %v149 = vrot.slane %v148, 4
      %v150 = vadd.f32 %v148, %v149
      %v151 = vrot.slane %v150, 2
      %v152 = vadd.f32 %v150, %v151
      %v153 = vrot.slane %v152, 1
      %v154 = vadd.f32 %v152, %v153
      %s155 = vtos %v154
      %s156 = scalar_lea.smem [#allocation3], 0
      %157 = sst [smem:[%s156]] %s155
    $region25: #{multi_fidelity_loss.1} parent=1 // pred_fallthru
      _
    // Predicated region
    $region26: #{multi_fidelity_loss.1} parent=1 // pred_check
      _
    $region27: #{multi_fidelity_loss.1} parent=1 // pred_check_branch
      %159 = sbr.rel (0) target = $region29
    $region28: #{multi_fidelity_loss.1} parent=1 // pred_region
      %161 = vsyncadd [#allocation4], 0
      %s163 = sshll.u32 %s2, 4
      %s164 = int_to_ptr.hbm [resolvable:$true] %s163
      %166 = dma.smem_to_hbm [#allocation3], 16, %s164, [#allocation4]
    $region29: #{multi_fidelity_loss.1} parent=1 // pred_fallthru
      _
    // Predicated region
    $region30: #{multi_fidelity_loss.1} parent=1 // pred_check
      _
    $region31: #{multi_fidelity_loss.1} parent=1 // pred_check_branch
      %168 = sbr.rel (0) target = $region33
    $region32: #{multi_fidelity_loss.1} parent=1 // pred_region
      %170 = dma.done [#allocation4], 16
    $region33: #{multi_fidelity_loss.1} parent=1 // pred_fallthru
      _
    %171 = sfence
    %172 = vsyncpa [#allocation4], 1

</llo_original>
